<compile_context>
chip_gen: v5e
topology: v5e:2x2
jax: 0.10.0
libtpu: 0.0.40
codegen_flags: <defaults>
</compile_context>

<pallas_src>
import jax
import jax.numpy as jnp
from jax import lax
from jax.experimental import pallas as pl
from jax.experimental.pallas import tpu as pltpu

EPS = 1e-5

# Above the 32 MiB default scoped limit (v6e/v7x) but with headroom for v7x's
# 64 MiB physical VMEM. At the shapes used here the kernels need far less.
_VMEM_LIMIT_BYTES = 48 * 1024 * 1024


def linear_bn_relu_kernel(x_ref, w1_ref, gamma_ref, beta_ref, hr_ref):
    """One H-tile of: h = x @ w1 ; BN(batch stats, affine) ; ReLU."""
    # bf16 operands straight into the MXU, f32 accumulation.
    h = jnp.dot(x_ref[...], w1_ref[...],
                preferred_element_type=jnp.float32)          # (B, TN1) f32

    # Batch statistics over the batch (sublane) axis. Biased variance, like
    # PyTorch's training-mode forward. (XLU sublane reduce is not the binding
    # slot here; switch to an MXU ones-vector dot only if profiling says so.)
    mean = jnp.mean(h, axis=0, keepdims=True)                # (1, TN1)
    centered = h - mean
    var = jnp.mean(centered * centered, axis=0, keepdims=True)

    # Fold gamma into the inverse std: one (B, TN1) mul + one add total.
    scale = lax.rsqrt(var + EPS) * gamma_ref[...]            # (1, TN1)
    hn = centered * scale + beta_ref[...]

    hr_ref[...] = jnp.maximum(hn, 0.0).astype(hr_ref.dtype)  # bf16 activations


def linear_bias_kernel(hr_ref, w2_ref, b2_ref, o_ref, acc_ref):
    """K-tiled out = hr @ w2 + b2 with an f32 VMEM accumulator."""
    k = pl.program_id(1)

    @pl.when(k == 0)
    def _():
        acc_ref[...] = jnp.zeros_like(acc_ref)

    acc_ref[...] += jnp.dot(hr_ref[...], w2_ref[...],
                            preferred_element_type=jnp.float32)

    @pl.when(k == pl.num_programs(1) - 1)
    def _():
        o_ref[...] = (acc_ref[...] + b2_ref[...]).astype(o_ref.dtype)


def mlp_forward(x, w1, gamma, beta, w2, b2, *, tn1=256, tk2=256, tn2=128):
    """Forward pass of the SimSiam projector MLP.

    x:  (B, D_in)         activations
    w1: (D_in, H)         Linear1 weight (pre-transposed, no bias)
    gamma, beta: (1, H)   BatchNorm1d affine parameters (f32)
    w2: (H, D_out)        Linear2 weight (pre-transposed)
    b2: (1, D_out)        Linear2 bias (f32)
    """
    B, D_in = x.shape
    H = w1.shape[1]
    D_out = w2.shape[1]

    tn1 = min(tn1, H)
    tk2 = min(tk2, H)
    tn2 = min(tn2, D_out)
    assert H % tn1 == 0 and H % tk2 == 0 and D_out % tn2 == 0
    assert D_in % 128 == 0 and H % 128 == 0 and D_out % 128 == 0, (
        "feature dims must be lane-aligned (multiples of 128)")
    assert B % 8 == 0, "batch must be sublane-aligned (multiple of 8)"

    # bf16 MXU operands; BN/affine params stay f32.
    x_bf = x.astype(jnp.bfloat16)
    w1_bf = w1.astype(jnp.bfloat16)
    w2_bf = w2.astype(jnp.bfloat16)

    # ---- Stage 1: Linear1 + BatchNorm + ReLU, gridded over H tiles ----------
    hr = pl.pallas_call(
        linear_bn_relu_kernel,
        out_shape=jax.ShapeDtypeStruct((B, H), jnp.bfloat16),
        grid_spec=pltpu.PrefetchScalarGridSpec(
            num_scalar_prefetch=0,
            grid=(H // tn1,),
            in_specs=[
                pl.BlockSpec((B, D_in), lambda j: (0, 0)),      # full batch, full K
                pl.BlockSpec((D_in, tn1), lambda j: (0, j)),    # streamed weight tile
                pl.BlockSpec((1, tn1), lambda j: (0, j)),       # gamma tile
                pl.BlockSpec((1, tn1), lambda j: (0, j)),       # beta tile
            ],
            out_specs=pl.BlockSpec((B, tn1), lambda j: (0, j)),
        ),
        compiler_params=pltpu.CompilerParams(
            dimension_semantics=("parallel",),
            vmem_limit_bytes=_VMEM_LIMIT_BYTES,
        ),
    )(x_bf, w1_bf, gamma, beta)

    # ---- Stage 2: Linear2 + bias, (N-tile, K-tile) grid with accumulator ----
    out = pl.pallas_call(
        linear_bias_kernel,
        out_shape=jax.ShapeDtypeStruct((B, D_out), jnp.float32),
        grid_spec=pltpu.PrefetchScalarGridSpec(
            num_scalar_prefetch=0,
            grid=(D_out // tn2, H // tk2),
            in_specs=[
                pl.BlockSpec((B, tk2), lambda j, k: (0, k)),
                pl.BlockSpec((tk2, tn2), lambda j, k: (k, j)),
                pl.BlockSpec((1, tn2), lambda j, k: (0, j)),
            ],
            out_specs=pl.BlockSpec((B, tn2), lambda j, k: (0, j)),
            scratch_shapes=[pltpu.VMEM((B, tn2), jnp.float32)],
        ),
        compiler_params=pltpu.CompilerParams(
            dimension_semantics=("parallel", "arbitrary"),
            vmem_limit_bytes=_VMEM_LIMIT_BYTES,
        ),
    )(hr, w2_bf, b2)

    return out


def reference_forward(x, w1, gamma, beta, w2, b2):
    """Pure-JAX reference with the same bf16 operand rounding as the kernel."""
    xf = x.astype(jnp.bfloat16).astype(jnp.float32)
    w1f = w1.astype(jnp.bfloat16).astype(jnp.float32)
    w2f = w2.astype(jnp.bfloat16).astype(jnp.float32)

    h = jnp.dot(xf, w1f, precision=lax.Precision.HIGHEST)
    mean = h.mean(axis=0, keepdims=True)
    var = ((h - mean) ** 2).mean(axis=0, keepdims=True)
    hn = (h - mean) * lax.rsqrt(var + EPS) * gamma + beta
    hr = jnp.maximum(hn, 0.0)
    # Kernel stores the intermediate activations as bf16 — mirror that.
    hrb = hr.astype(jnp.bfloat16).astype(jnp.float32)
    return jnp.dot(hrb, w2f, precision=lax.Precision.HIGHEST) + b2


if __name__ == "__main__":
    # Small but lane-aligned shapes consistent with MLP(input_dim, hidden, out).
    B, D_IN, HIDDEN, D_OUT = 16, 256, 512, 256

    key = jax.random.PRNGKey(0)
    kx, kw1, kw2, kb2, kg, kb = jax.random.split(key, 6)

    x = jax.random.normal(kx, (B, D_IN), dtype=jnp.float32)

    # Kaiming-uniform-ish init, like nn.Linear defaults.
    w1 = jax.random.uniform(kw1, (D_IN, HIDDEN), dtype=jnp.float32,
                            minval=-1.0, maxval=1.0) / jnp.sqrt(D_IN)
    w2 = jax.random.uniform(kw2, (HIDDEN, D_OUT), dtype=jnp.float32,
                            minval=-1.0, maxval=1.0) / jnp.sqrt(HIDDEN)
    b2 = jax.random.uniform(kb2, (1, D_OUT), dtype=jnp.float32,
                            minval=-1.0, maxval=1.0) / jnp.sqrt(HIDDEN)

    # Non-trivial BN affine params to exercise the folded-scale path.
    gamma = 1.0 + 0.1 * jax.random.normal(kg, (1, HIDDEN), dtype=jnp.float32)
    beta = 0.1 * jax.random.normal(kb, (1, HIDDEN), dtype=jnp.float32)

    out = mlp_forward(x, w1, gamma, beta, w2, b2)
    out = jax.block_until_ready(out)

    ref = reference_forward(x, w1, gamma, beta, w2, b2)
    assert out.shape == (B, D_OUT)
    assert jnp.allclose(out, ref, atol=2e-2, rtol=2e-2), (
        float(jnp.max(jnp.abs(out - ref))))

    print("KERNEL_OK")
</pallas_src>

<mosaic_0001>
module attributes {stable_mosaic.version = 11 : i64} {
  func.func @linear_bn_relu_kernel(%arg0: i32, %arg1: memref<16x256xbf16, #tpu.memory_space<vmem>>, %arg2: memref<256x256xbf16, #tpu.memory_space<vmem>>, %arg3: memref<1x256xf32, #tpu.memory_space<vmem>>, %arg4: memref<1x256xf32, #tpu.memory_space<vmem>>, %arg5: memref<16x256xbf16, #tpu.memory_space<vmem>>) attributes {dimension_semantics = [#tpu.dimension_semantics<parallel>], iteration_bounds = array<i64: 2>, scalar_prefetch = 0 : i64, scratch_operands = 0 : i64, tpu.core_type = #tpu.core_type<tc>, window_params = [{pipeline_mode = #tpu.pipeline_mode<synchronous>, transform_indices = @transform_0, window_bounds = array<i64: 16, 256>}, {transform_indices = @transform_1, window_bounds = array<i64: 256, 256>}, {transform_indices = @transform_2, window_bounds = array<i64: 1, 256>}, {transform_indices = @transform_3, window_bounds = array<i64: 1, 256>}, {transform_indices = @transform_4, window_bounds = array<i64: 16, 256>}]} {
    %c0 = arith.constant 0 : index
    %c0_0 = arith.constant 0 : index
    %0 = vector.load %arg1[%c0, %c0_0] : memref<16x256xbf16, #tpu.memory_space<vmem>>, vector<16x256xbf16>
    %c0_1 = arith.constant 0 : index
    %c0_2 = arith.constant 0 : index
    %1 = vector.load %arg2[%c0_1, %c0_2] : memref<256x256xbf16, #tpu.memory_space<vmem>>, vector<256x256xbf16>
    %cst = arith.constant dense<0.000000e+00> : vector<16x256xf32>
    %2 = tpu.matmul %0, %1, %cst {dimension_numbers = #tpu.dot_dimension_numbers<[1], [0], [0], [1], [0, 0, 1, 1], [], []>} : vector<16x256xbf16>, vector<256x256xbf16>, vector<16x256xf32> -> vector<16x256xf32>
    %cst_3 = arith.constant dense<0.000000e+00> : vector<256xf32>
    %3 = vector.multi_reduction <add>, %2, %cst_3 [0] : vector<16x256xf32> to vector<256xf32>
    %4 = vector.shape_cast %3 : vector<256xf32> to vector<1x256xf32>
    %cst_4 = arith.constant 1.600000e+01 : f32
    %5 = vector.broadcast %cst_4 : f32 to vector<1x256xf32>
    %6 = arith.divf %4, %5 : vector<1x256xf32>
    %7 = vector.broadcast %6 : vector<1x256xf32> to vector<16x256xf32>
    %8 = arith.subf %2, %7 : vector<16x256xf32>
    %9 = arith.mulf %8, %8 : vector<16x256xf32>
    %cst_5 = arith.constant dense<0.000000e+00> : vector<256xf32>
    %10 = vector.multi_reduction <add>, %9, %cst_5 [0] : vector<16x256xf32> to vector<256xf32>
    %11 = vector.shape_cast %10 : vector<256xf32> to vector<1x256xf32>
    %cst_6 = arith.constant 1.600000e+01 : f32
    %12 = vector.broadcast %cst_6 : f32 to vector<1x256xf32>
    %13 = arith.divf %11, %12 : vector<1x256xf32>
    %cst_7 = arith.constant 9.99999974E-6 : f32
    %14 = vector.broadcast %cst_7 : f32 to vector<1x256xf32>
    %15 = arith.addf %13, %14 : vector<1x256xf32>
    %16 = math.rsqrt %15 : vector<1x256xf32>
    %c0_8 = arith.constant 0 : index
    %c0_9 = arith.constant 0 : index
    %17 = vector.load %arg3[%c0_8, %c0_9] : memref<1x256xf32, #tpu.memory_space<vmem>>, vector<1x256xf32>
    %18 = arith.mulf %16, %17 : vector<1x256xf32>
    %19 = vector.broadcast %18 : vector<1x256xf32> to vector<16x256xf32>
    %20 = arith.mulf %8, %19 : vector<16x256xf32>
    %c0_10 = arith.constant 0 : index
    %c0_11 = arith.constant 0 : index
    %21 = vector.load %arg4[%c0_10, %c0_11] : memref<1x256xf32, #tpu.memory_space<vmem>>, vector<1x256xf32>
    %22 = vector.broadcast %21 : vector<1x256xf32> to vector<16x256xf32>
    %23 = arith.addf %20, %22 : vector<16x256xf32>
    %cst_12 = arith.constant 0.000000e+00 : f32
    %24 = vector.broadcast %cst_12 : f32 to vector<16x256xf32>
    %25 = arith.maximumf %23, %24 : vector<16x256xf32>
    %26 = arith.truncf %25 : vector<16x256xf32> to vector<16x256xbf16>
    %c0_13 = arith.constant 0 : index
    %c0_14 = arith.constant 0 : index
    %27 = vector.load %arg5[%c0_13, %c0_14] : memref<16x256xbf16, #tpu.memory_space<vmem>>, vector<16x256xbf16>
    tpu.vector_store %arg5[%c0_13, %c0_14], %26 {strides = array<i32>} : memref<16x256xbf16, #tpu.memory_space<vmem>>, vector<16x256xbf16>,
    return
  }
  func.func @transform_0(%arg0: i32) -> (i32, i32) {
    %c0_i32 = arith.constant 0 : i32
    %c0_i32_0 = arith.constant 0 : i32
    %c0_i32_1 = arith.constant 0 : i32
    return %c0_i32, %c0_i32_0 : i32, i32
  }
  func.func @transform_1(%arg0: i32) -> (i32, i32) {
    %c0_i32 = arith.constant 0 : i32
    %c0_i32_0 = arith.constant 0 : i32
    return %c0_i32, %arg0 : i32, i32
  }
  func.func @transform_2(%arg0: i32) -> (i32, i32) {
    %c0_i32 = arith.constant 0 : i32
    %c0_i32_0 = arith.constant 0 : i32
    return %c0_i32, %arg0 : i32, i32
  }
  func.func @transform_3(%arg0: i32) -> (i32, i32) {
    %c0_i32 = arith.constant 0 : i32
    %c0_i32_0 = arith.constant 0 : i32
    return %c0_i32, %arg0 : i32, i32
  }
  func.func @transform_4(%arg0: i32) -> (i32, i32) {
    %c0_i32 = arith.constant 0 : i32
    %c0_i32_0 = arith.constant 0 : i32
    return %c0_i32, %arg0 : i32, i32
  }
}

</mosaic_0001>

<llo_original>
// kernel: tpu_custom_call.1
$region0: #{tpu_custom_call.1}
  #allocation0 [shape = 'u32[]', space=smem, size = 0x4, offset = 0x4, fixed_abs, tag = 'smem constant byte address 0x4 - core index']
  #allocation1 [shape = 'u32[72,128]{1,0:T(1,128)}', space=vmem, size = 0x9000, scoped, tag = 'internal scratch']
  %s0 = inlined_call_operand.hbm [shape: bf16[16,256], index: 0, kind: input, shape index: {}]
  %s1 = inlined_call_operand.hbm [shape: bf16[256,512], index: 1, kind: input, shape index: {}]
  %s2 = inlined_call_operand.hbm [shape: f32[1,512], index: 2, kind: input, shape index: {}]
  %s3 = inlined_call_operand.hbm [shape: f32[1,512], index: 3, kind: input, shape index: {}]
  %s4 = inlined_call_operand.hbm [shape: bf16[16,512], index: 4, kind: output, shape index: {}]
  %s5 = sld [smem:[#allocation0]]
  $region65: #{tpu_custom_call.1} parent=0
    _
  %s7 = ssub.s32 1, %s5
  %s8 = scalar_select 0, %s7, %s5
  $region1: #{tpu_custom_call.1} parent=0
    #allocation2 [shape = 'u8[8192]{0}', space=vmem, size = 0x2000, scoped, tag = 'input window, operand 0, single buffered']
    #allocation3 [shape = 's32[2]{0}', space=sflag, size = 0x8, scoped, tag = 'scoped memory for tpu_custom_call.1']
    #allocation4 [shape = 's32[2]{0}', space=sflag, size = 0x8, scoped, tag = 'scoped memory for tpu_custom_call.1']
    #allocation5 [shape = 'u8[262144]{0}', space=vmem, size = 0x40000, scoped, tag = 'input window, operand 1']
    #allocation6 [shape = 's32[2]{0}', space=sflag, size = 0x8, scoped, tag = 'scoped memory for tpu_custom_call.1']
    #allocation7 [shape = 'u8[2048]{0}', space=vmem, size = 0x800, scoped, tag = 'input window, operand 2']
    #allocation8 [shape = 'u8[2048]{0}', space=vmem, size = 0x800, scoped, tag = 'input window, operand 3']
    #allocation9 [shape = 's32[2]{0}', space=sflag, size = 0x8, scoped, tag = 'scoped memory for tpu_custom_call.1']
    #allocation10 [shape = 'u8[16384]{0}', space=vmem, size = 0x4000, scoped, tag = 'output window, operand 0']
    %9 = vsyncpa [#allocation3], 0
    %10 = vsyncpa [#allocation6], 0
    %s11 = scalar_lea.sflag [#allocation6], 1
    %12 = vsyncpa %s11, 0
    %13 = vsyncpa [#allocation9], 0
    %s14 = scalar_lea.sflag [#allocation9], 1
    %15 = vsyncpa %s14, 0
    %16 = vsyncpa [#allocation4], 0
    %s17 = scalar_lea.sflag [#allocation4], 1
    %18 = vsyncpa %s17, 0
    loop: start=0, step=1, limit=4
    $region2: #{tpu_custom_call.1} parent=1 // loop_pre_header
      _
    $region3: #{tpu_custom_call.1} parent=1 // loop_header
      %s20 = sphi 0, %s24
      %p21 = scmp.ge.s32.totalorder %s20, 4
      %s28 = sphi 0, %s28
      %s30 = sphi 0, %s28
      %s31 = sphi 0, %s30
      %s45 = sphi 0, %s31
      %s51 = sphi 0, %s53
      %s54 = sphi 0, %s51
      %s55 = sphi 0, %s54
      %s71 = sphi 0, %s55
      %s77 = sphi 0, %s79
      %s80 = sphi 0, %s77
      %s81 = sphi 0, %s80
      %s97 = sphi 0, %s81
      %s103 = sphi 0, %s105
      %s106 = sphi 0, %s103
      %s107 = sphi 0, %s106
      %s123 = sphi 0, %s107
      %s129 = sphi 0, %s131
      %s132 = sphi 0, %s129
      %s133 = sphi 0, %s132
      %s149 = sphi 0, %s133
    $region4: #{tpu_custom_call.1} parent=1 // loop_header_branch
      %23 = sbr.rel (%p21) target = $region8
    $region5: #{tpu_custom_call.1} parent=1 // loop_body
      %s25 = ssub.s32 %s20, 1
      %s26 = ssub.s32 %s20, 2
      %s27 = sadd.s32 %s20, 1
      %s29 = sadd.s32 %s28, 1
      %p32 = scmp.eq.s32.totalorder %s20, 1
      %p33 = scmp.ne.s32.totalorder %s28, %s30
      %p34 = scmp.eq.s32.totalorder %s20, 0
      %p35 = por %p33, %p34
      %p36 = scmp.ne.s32.totalorder %s28, %s30
      %p37 = scmp.eq.s32.totalorder %s25, 1
      %p38 = por %p36, %p37
      %p39 = scmp.ne.s32.totalorder %s30, %s31
      %p40 = scmp.eq.s32.totalorder %s25, 0
      %p41 = por %p39, %p40
      %p42 = scmp.ne.s32.totalorder %s30, %s31
      %p43 = scmp.eq.s32.totalorder %s26, 1
      %p44 = por %p42, %p43
      %p46 = scmp.ne.s32.totalorder %s31, %s45
      %p47 = scmp.eq.s32.totalorder %s26, 0
      %p48 = por %p46, %p47
      %s49 = ssub.s32 %s20, %s27
      %p50 = scmp.eq.s32.totalorder %s49, 0
      %s52 = sadd.s32 %s51, 1
      %s53 = scalar_select %p50, %s51, %s52
      %p56 = pneg %p50
      %p57 = scmp.eq.s32.totalorder %s20, 1
      %p58 = por %p56, %p57
      %p59 = scmp.ne.s32.totalorder %s51, %s54
      %p60 = scmp.eq.s32.totalorder %s20, 0
      %p61 = por %p59, %p60
      %p62 = scmp.ne.s32.totalorder %s51, %s54
      %p63 = scmp.eq.s32.totalorder %s25, 1
      %p64 = por %p62, %p63
      %p65 = scmp.ne.s32.totalorder %s54, %s55
      %p66 = scmp.eq.s32.totalorder %s25, 0
      %p67 = por %p65, %p66
      %p68 = scmp.ne.s32.totalorder %s54, %s55
      %p69 = scmp.eq.s32.totalorder %s26, 1
      %p70 = por %p68, %p69
      %p72 = scmp.ne.s32.totalorder %s55, %s71
      %p73 = scmp.eq.s32.totalorder %s26, 0
      %p74 = por %p72, %p73
      %s75 = ssub.s32 %s20, %s27
      %p76 = scmp.eq.s32.totalorder %s75, 0
      %s78 = sadd.s32 %s77, 1
      %s79 = scalar_select %p76, %s77, %s78
      %p82 = pneg %p76
      %p83 = scmp.eq.s32.totalorder %s20, 1
      %p84 = por %p82, %p83
      %p85 = scmp.ne.s32.totalorder %s77, %s80
      %p86 = scmp.eq.s32.totalorder %s20, 0
      %p87 = por %p85, %p86
      %p88 = scmp.ne.s32.totalorder %s77, %s80
      %p89 = scmp.eq.s32.totalorder %s25, 1
      %p90 = por %p88, %p89
      %p91 = scmp.ne.s32.totalorder %s80, %s81
      %p92 = scmp.eq.s32.totalorder %s25, 0
      %p93 = por %p91, %p92
      %p94 = scmp.ne.s32.totalorder %s80, %s81
      %p95 = scmp.eq.s32.totalorder %s26, 1
      %p96 = por %p94, %p95
      %p98 = scmp.ne.s32.totalorder %s81, %s97
      %p99 = scmp.eq.s32.totalorder %s26, 0
      %p100 = por %p98, %p99
      %s101 = ssub.s32 %s20, %s27
      %p102 = scmp.eq.s32.totalorder %s101, 0
      %s104 = sadd.s32 %s103, 1
      %s105 = scalar_select %p102, %s103, %s104
      %p108 = pneg %p102
      %p109 = scmp.eq.s32.totalorder %s20, 1
      %p110 = por %p108, %p109
      %p111 = scmp.ne.s32.totalorder %s103, %s106
      %p112 = scmp.eq.s32.totalorder %s20, 0
      %p113 = por %p111, %p112
      %p114 = scmp.ne.s32.totalorder %s103, %s106
      %p115 = scmp.eq.s32.totalorder %s25, 1
      %p116 = por %p114, %p115
      %p117 = scmp.ne.s32.totalorder %s106, %s107
      %p118 = scmp.eq.s32.totalorder %s25, 0
      %p119 = por %p117, %p118
      %p120 = scmp.ne.s32.totalorder %s106, %s107
      %p121 = scmp.eq.s32.totalorder %s26, 1
      %p122 = por %p120, %p121
      %p124 = scmp.ne.s32.totalorder %s107, %s123
      %p125 = scmp.eq.s32.totalorder %s26, 0
      %p126 = por %p124, %p125
      %s127 = ssub.s32 %s20, %s27
      %p128 = scmp.eq.s32.totalorder %s127, 0
      %s130 = sadd.s32 %s129, 1
      %s131 = scalar_select %p128, %s129, %s130
      %p134 = pneg %p128
      %p135 = scmp.eq.s32.totalorder %s20, 1
      %p136 = por %p134, %p135
      %p137 = scmp.ne.s32.totalorder %s129, %s132
      %p138 = scmp.eq.s32.totalorder %s20, 0
      %p139 = por %p137, %p138
      %p140 = scmp.ne.s32.totalorder %s129, %s132
      %p141 = scmp.eq.s32.totalorder %s25, 1
      %p142 = por %p140, %p141
      %p143 = scmp.ne.s32.totalorder %s132, %s133
      %p144 = scmp.eq.s32.totalorder %s25, 0
      %p145 = por %p143, %p144
      %p146 = scmp.ne.s32.totalorder %s132, %s133
      %p147 = scmp.eq.s32.totalorder %s26, 1
      %p148 = por %p146, %p147
      %p150 = scmp.ne.s32.totalorder %s133, %s149
      %p151 = scmp.eq.s32.totalorder %s26, 0
      %p152 = por %p150, %p151
      %p153 = scmp.le.s32.totalorder 1, %s20
      %p154 = scmp.lt.s32.totalorder %s20, 3
      %p155 = pnand %p153, %p154
      %p156 = pneg %p155
      // Predicated region
      $region9: #{tpu_custom_call.1} parent=5 // pred_check
        _
      $region10: #{tpu_custom_call.1} parent=5 // pred_check_branch
        %158 = sbr.rel (%p155) target = $region12
      $region11: #{tpu_custom_call.1} parent=5 // pred_region
        %s159 = ssub.s32 %s20, 1
        // Predicated region
        $region13: #{tpu_custom_call.1} parent=11 // pred_check
          %p160 = pneg %p41
        $region14: #{tpu_custom_call.1} parent=11 // pred_check_branch
          %162 = sbr.rel (%p160) target = $region16
        $region15: #{tpu_custom_call.1} parent=11 // pred_region
          %164 = vsyncadd [#allocation3], 0
          %s165 = sshll.u32 %s0, 4
          %s166 = int_to_ptr.hbm [resolvable:$true] %s165
          %s167 = sshll.u32 [#allocation2], 4
          %s168 = int_to_ptr.vmem [resolvable:$true] %s167
          %173 = dma.hbm_to_vmem [thread:$0]  %s166, 256, %s168, [#allocation3], 128, 128, 8
        $region16: #{tpu_custom_call.1} parent=11 // pred_fallthru
          _
      $region12: #{tpu_custom_call.1} parent=5 // pred_fallthru
        _
      %p174 = scmp.lt.s32.totalorder %s20, 2
      // Predicated region
      $region17: #{tpu_custom_call.1} parent=5 // pred_check
        %p175 = pneg %p174
      $region18: #{tpu_custom_call.1} parent=5 // pred_check_branch
        %177 = sbr.rel (%p175) target = $region20
      $region19: #{tpu_custom_call.1} parent=5 // pred_region
        // Predicated region
        $region21: #{tpu_custom_call.1} parent=19 // pred_check
          %p178 = pneg %p61
        $region22: #{tpu_custom_call.1} parent=19 // pred_check_branch
          %180 = sbr.rel (%p178) target = $region24
        $region23: #{tpu_custom_call.1} parent=19 // pred_region
          %s181 = sand.u32 %s20, 1
          %s182 = scalar_lea.sflag [#allocation6], %s181
          %s183 = sand.u32 %s51, 1
          %s184 = smul.addr %s183, 256
          %s185 = scalar_lea.vmem [#allocation5], %s184
          %s186 = smul.u32 2, %s20
          %188 = vsyncadd %s182, 0
          %s189 = smul.addr %s186, 4
          %s190 = scalar_lea.hbm %s1, %s189
          %s191 = sshll.u32 %s190, 4
          %s192 = int_to_ptr.hbm [resolvable:$true] %s191
          %s193 = sshll.u32 %s185, 4
          %s194 = int_to_ptr.vmem [resolvable:$true] %s193
          %199 = dma.hbm_to_vmem [thread:$0]  %s192, 4096, %s194, %s182, 256, 128, 8
        $region24: #{tpu_custom_call.1} parent=19 // pred_fallthru
          _
        // Predicated region
        $region25: #{tpu_custom_call.1} parent=19 // pred_check
          %p200 = pneg %p87
        $region26: #{tpu_custom_call.1} parent=19 // pred_check_branch
          %202 = sbr.rel (%p200) target = $region28
        $region27: #{tpu_custom_call.1} parent=19 // pred_region
          %s203 = sand.u32 %s20, 1
          %s204 = scalar_lea.sflag [#allocation6], %s203
          %s205 = sand.u32 %s77, 1
          %s206 = smul.addr %s205, 2
          %s207 = scalar_lea.vmem [#allocation7], %s206
          %s208 = smul.u32 2, %s20
          %210 = vsyncadd %s204, 0
          %s211 = scalar_lea.hbm %s2, %s208
          %s213 = sshll.u32 %s211, 4
          %s214 = int_to_ptr.hbm [resolvable:$true] %s213
          %s215 = sshll.u32 %s207, 4
          %s216 = int_to_ptr.vmem [resolvable:$true] %s215
          %218 = dma.hbm_to_vmem [thread:$0]  %s214, 32, %s216, %s204
        $region28: #{tpu_custom_call.1} parent=19 // pred_fallthru
          _
        // Predicated region
        $region29: #{tpu_custom_call.1} parent=19 // pred_check
          %p219 = pneg %p113
        $region30: #{tpu_custom_call.1} parent=19 // pred_check_branch
          %221 = sbr.rel (%p219) target = $region32
        $region31: #{tpu_custom_call.1} parent=19 // pred_region
          %s222 = sand.u32 %s103, 1
          %s223 = scalar_lea.sflag [#allocation9], %s222
          %s224 = sand.u32 %s103, 1
          %s225 = smul.addr %s224, 2
          %s226 = scalar_lea.vmem [#allocation8], %s225
          %s227 = smul.u32 2, %s20
          %229 = vsyncadd %s223, 0
          %s230 = scalar_lea.hbm %s3, %s227
          %s232 = sshll.u32 %s230, 4
          %s233 = int_to_ptr.hbm [resolvable:$true] %s232
          %s234 = sshll.u32 %s226, 4
          %s235 = int_to_ptr.vmem [resolvable:$true] %s234
          %237 = dma.hbm_to_vmem [thread:$0]  %s233, 32, %s235, %s223
        $region32: #{tpu_custom_call.1} parent=19 // pred_fallthru
          _
      $region20: #{tpu_custom_call.1} parent=5 // pred_fallthru
        _
      %p238 = scmp.le.s32.totalorder 1, %s20
      %p239 = scmp.lt.s32.totalorder %s20, 3
      %p240 = pnand %p238, %p239
      %p241 = pneg %p240
      // Predicated region
      $region33: #{tpu_custom_call.1} parent=5 // pred_check
        _
      $region34: #{tpu_custom_call.1} parent=5 // pred_check_branch
        %243 = sbr.rel (%p240) target = $region36
      $region35: #{tpu_custom_call.1} parent=5 // pred_region
        %s244 = ssub.s32 %s20, 1
        // Predicated region
        $region37: #{tpu_custom_call.1} parent=35 // pred_check
          %p245 = pneg %p41
        $region38: #{tpu_custom_call.1} parent=35 // pred_check_branch
          %247 = sbr.rel (%p245) target = $region40
        $region39: #{tpu_custom_call.1} parent=35 // pred_region
          %249 = dma.done [#allocation3], 256
        $region40: #{tpu_custom_call.1} parent=35 // pred_fallthru
          _
        %s250 = sand.u32 %s25, 1
        %s251 = scalar_lea.sflag [#allocation6], %s250
        %s252 = sand.u32 %s54, 1
        %s253 = smul.addr %s252, 256
        %s254 = scalar_lea.vmem [#allocation5], %s253
        // Predicated region
        $region41: #{tpu_custom_call.1} parent=35 // pred_check
          %p255 = pneg %p67
        $region42: #{tpu_custom_call.1} parent=35 // pred_check_branch
          %257 = sbr.rel (%p255) target = $region44
        $region43: #{tpu_custom_call.1} parent=35 // pred_region
          %259 = dma.done %s251, 4096
        $region44: #{tpu_custom_call.1} parent=35 // pred_fallthru
          _
        %s260 = sand.u32 %s25, 1
        %s261 = scalar_lea.sflag [#allocation6], %s260
        %s262 = sand.u32 %s80, 1
        %s263 = smul.addr %s262, 2
        %s264 = scalar_lea.vmem [#allocation7], %s263
        // Predicated region
        $region45: #{tpu_custom_call.1} parent=35 // pred_check
          %p265 = pneg %p93
        $region46: #{tpu_custom_call.1} parent=35 // pred_check_branch
          %267 = sbr.rel (%p265) target = $region48
        $region47: #{tpu_custom_call.1} parent=35 // pred_region
          %269 = dma.done %s261, 32
        $region48: #{tpu_custom_call.1} parent=35 // pred_fallthru
          _
        %s270 = sand.u32 %s106, 1
        %s271 = scalar_lea.sflag [#allocation9], %s270
        %s272 = sand.u32 %s106, 1
        %s273 = smul.addr %s272, 2
        %s274 = scalar_lea.vmem [#allocation8], %s273
        // Predicated region
        $region49: #{tpu_custom_call.1} parent=35 // pred_check
          %p275 = pneg %p119
        $region50: #{tpu_custom_call.1} parent=35 // pred_check_branch
          %277 = sbr.rel (%p275) target = $region52
        $region51: #{tpu_custom_call.1} parent=35 // pred_region
          %279 = dma.done %s271, 32
        $region52: #{tpu_custom_call.1} parent=35 // pred_fallthru
          _
        %p280 = pneg %p41
        %p281 = pneg %p38
        %s282 = sand.u32 %s25, 1
        %s283 = scalar_lea.sflag [#allocation6], %s282
        %s284 = sand.u32 %s54, 1
        %s285 = smul.addr %s284, 256
        %s286 = scalar_lea.vmem [#allocation5], %s285
        %p287 = pneg %p67
        %p288 = pneg %p64
        %s289 = sand.u32 %s25, 1
        %s290 = scalar_lea.sflag [#allocation6], %s289
        %s291 = sand.u32 %s80, 1
        %s292 = smul.addr %s291, 2
        %s293 = scalar_lea.vmem [#allocation7], %s292
        %p294 = pneg %p93
        %p295 = pneg %p90
        %s296 = sand.u32 %s106, 1
        %s297 = scalar_lea.sflag [#allocation9], %s296
        %s298 = sand.u32 %s106, 1
        %s299 = smul.addr %s298, 2
        %s300 = scalar_lea.vmem [#allocation8], %s299
        %p301 = pneg %p119
        %p302 = pneg %p116
        %p303 = pneg %p145
        %p304 = pneg %p142
        %s305 = sand.u32 %s132, 1
        %s306 = scalar_lea.sflag [#allocation4], %s305
        %s307 = sand.u32 %s132, 1
        %s308 = smul.addr %s307, 16
        %s309 = scalar_lea.vmem [#allocation10], %s308
        %s310 = smul.u32 2, %s25
        %s311 = smul.u32 2, %s25
        %s312 = smul.u32 2, %s25
        %s313 = smul.u32 2, %s25
        %v314 = vld [vmem:[#allocation2] sm:$0xff]
        %v315 = vld [vmem:[#allocation2 + $0x8] sm:$0xff]
        %v316 = vld [vmem:[%s254] sm:$0xff]
        %v317 = vld [vmem:[%s254 + $0x8] sm:$0xff]
        %v318 = vld [vmem:[%s254 + $0x10] sm:$0xff]
        %v319 = vld [vmem:[%s254 + $0x18] sm:$0xff]
        %v320 = vld [vmem:[%s254 + $0x20] sm:$0xff]
        %v321 = vld [vmem:[%s254 + $0x28] sm:$0xff]
        %v322 = vld [vmem:[%s254 + $0x30] sm:$0xff]
        %v323 = vld [vmem:[%s254 + $0x38] sm:$0xff]
        %v324 = vld [vmem:[%s254 + $0x40] sm:$0xff]
        %v325 = vld [vmem:[%s254 + $0x48] sm:$0xff]
        %v326 = vld [vmem:[%s254 + $0x50] sm:$0xff]
        %v327 = vld [vmem:[%s254 + $0x58] sm:$0xff]
        %v328 = vld [vmem:[%s254 + $0x60] sm:$0xff]
        %v329 = vld [vmem:[%s254 + $0x68] sm:$0xff]
        %v330 = vld [vmem:[%s254 + $0x70] sm:$0xff]
        %v331 = vld [vmem:[%s254 + $0x78] sm:$0xff]
        %v332 = vld [vmem:[%s254 + $0x80] sm:$0xff]
        %v333 = vld [vmem:[%s254 + $0x88] sm:$0xff]
        %v334 = vld [vmem:[%s254 + $0x90] sm:$0xff]
        %v335 = vld [vmem:[%s254 + $0x98] sm:$0xff]
        %v336 = vld [vmem:[%s254 + $0xa0] sm:$0xff]
        %v337 = vld [vmem:[%s254 + $0xa8] sm:$0xff]
        %v338 = vld [vmem:[%s254 + $0xb0] sm:$0xff]
        %v339 = vld [vmem:[%s254 + $0xb8] sm:$0xff]
        %v340 = vld [vmem:[%s254 + $0xc0] sm:$0xff]
        %v341 = vld [vmem:[%s254 + $0xc8] sm:$0xff]
        %v342 = vld [vmem:[%s254 + $0xd0] sm:$0xff]
        %v343 = vld [vmem:[%s254 + $0xd8] sm:$0xff]
        %v344 = vld [vmem:[%s254 + $0xe0] sm:$0xff]
        %v345 = vld [vmem:[%s254 + $0xe8] sm:$0xff]
        %v346 = vld [vmem:[%s254 + $0xf0] sm:$0xff]
        %v347 = vld [vmem:[%s254 + $0xf8] sm:$0xff]
        %v350 = vunpack.c.l.b16 %v314
        %v351 = vunpack.c.h.b16 %v314
        %v352 = vunpack.c.l.b16 %v315
        %v353 = vunpack.c.h.b16 %v315
        %v354 = vpack.c.b16 %v352, %v350
        %v355 = vpack.c.b16 %v353, %v351
        %v390 = vunpack.c.l.b16 %v316
        %v391 = vunpack.c.h.b16 %v316
        %v392 = vunpack.c.l.b16 %v317
        %v393 = vunpack.c.h.b16 %v317
        %v394 = vunpack.c.l.b16 %v318
        %v395 = vunpack.c.h.b16 %v318
        %v396 = vunpack.c.l.b16 %v319
        %v397 = vunpack.c.h.b16 %v319
        %v398 = vunpack.c.l.b16 %v320
        %v399 = vunpack.c.h.b16 %v320
        %v400 = vunpack.c.l.b16 %v321
        %v401 = vunpack.c.h.b16 %v321
        %v402 = vunpack.c.l.b16 %v322
        %v403 = vunpack.c.h.b16 %v322
        %v404 = vunpack.c.l.b16 %v323
        %v405 = vunpack.c.h.b16 %v323
        %v406 = vunpack.c.l.b16 %v324
        %v407 = vunpack.c.h.b16 %v324
        %v408 = vunpack.c.l.b16 %v325
        %v409 = vunpack.c.h.b16 %v325
        %v410 = vunpack.c.l.b16 %v326
        %v411 = vunpack.c.h.b16 %v326
        %v412 = vunpack.c.l.b16 %v327
        %v413 = vunpack.c.h.b16 %v327
        %v414 = vunpack.c.l.b16 %v328
        %v415 = vunpack.c.h.b16 %v328
        %v416 = vunpack.c.l.b16 %v329
        %v417 = vunpack.c.h.b16 %v329
        %v418 = vunpack.c.l.b16 %v330
        %v419 = vunpack.c.h.b16 %v330
        %v420 = vunpack.c.l.b16 %v331
        %v421 = vunpack.c.h.b16 %v331
        %v422 = vunpack.c.l.b16 %v332
        %v423 = vunpack.c.h.b16 %v332
        %v424 = vunpack.c.l.b16 %v333
        %v425 = vunpack.c.h.b16 %v333
        %v426 = vunpack.c.l.b16 %v334
        %v427 = vunpack.c.h.b16 %v334
        %v428 = vunpack.c.l.b16 %v335
        %v429 = vunpack.c.h.b16 %v335
        %v430 = vunpack.c.l.b16 %v336
        %v431 = vunpack.c.h.b16 %v336
        %v432 = vunpack.c.l.b16 %v337
        %v433 = vunpack.c.h.b16 %v337
        %v434 = vunpack.c.l.b16 %v338
        %v435 = vunpack.c.h.b16 %v338
        %v436 = vunpack.c.l.b16 %v339
        %v437 = vunpack.c.h.b16 %v339
        %v438 = vunpack.c.l.b16 %v340
        %v439 = vunpack.c.h.b16 %v340
        %v440 = vunpack.c.l.b16 %v341
        %v441 = vunpack.c.h.b16 %v341
        %v442 = vunpack.c.l.b16 %v342
        %v443 = vunpack.c.h.b16 %v342
        %v444 = vunpack.c.l.b16 %v343
        %v445 = vunpack.c.h.b16 %v343
        %v446 = vunpack.c.l.b16 %v344
        %v447 = vunpack.c.h.b16 %v344
        %v448 = vunpack.c.l.b16 %v345
        %v449 = vunpack.c.h.b16 %v345
        %v450 = vunpack.c.l.b16 %v346
        %v451 = vunpack.c.h.b16 %v346
        %v452 = vunpack.c.l.b16 %v347
        %v453 = vunpack.c.h.b16 %v347
        %v454 = vpack.c.b16 %v392, %v390
        %v455 = vpack.c.b16 %v393, %v391
        %v456 = vpack.c.b16 %v396, %v394
        %v457 = vpack.c.b16 %v397, %v395
        %v458 = vpack.c.b16 %v400, %v398
        %v459 = vpack.c.b16 %v401, %v399
        %v460 = vpack.c.b16 %v404, %v402
        %v461 = vpack.c.b16 %v405, %v403
        %v462 = vpack.c.b16 %v408, %v406
        %v463 = vpack.c.b16 %v409, %v407
        %v464 = vpack.c.b16 %v412, %v410
        %v465 = vpack.c.b16 %v413, %v411
        %v466 = vpack.c.b16 %v416, %v414
        %v467 = vpack.c.b16 %v417, %v415
        %v468 = vpack.c.b16 %v420, %v418
        %v469 = vpack.c.b16 %v421, %v419
        %v470 = vpack.c.b16 %v424, %v422
        %v471 = vpack.c.b16 %v425, %v423
        %v472 = vpack.c.b16 %v428, %v426
        %v473 = vpack.c.b16 %v429, %v427
        %v474 = vpack.c.b16 %v432, %v430
        %v475 = vpack.c.b16 %v433, %v431
        %v476 = vpack.c.b16 %v436, %v434
        %v477 = vpack.c.b16 %v437, %v435
        %v478 = vpack.c.b16 %v440, %v438
        %v479 = vpack.c.b16 %v441, %v439
        %v480 = vpack.c.b16 %v444, %v442
        %v481 = vpack.c.b16 %v445, %v443
        %v482 = vpack.c.b16 %v448, %v446
        %v483 = vpack.c.b16 %v449, %v447
        %v484 = vpack.c.b16 %v452, %v450
        %v485 = vpack.c.b16 %v453, %v451
        %518 = vmatpush.bf16.msra.mxu0 %v468
        %519 = vmatpush.bf16.msra.mxu0 %v466
        %520 = vmatpush.bf16.msra.mxu0 %v464
        %521 = vmatpush.bf16.msra.mxu0 %v462
        %522 = vmatpush.bf16.msra.mxu0 %v460
        %523 = vmatpush.bf16.msra.mxu0 %v458
        %524 = vmatpush.bf16.msra.mxu0 %v456
        %525 = vmatpush.bf16.msra.mxu0 %v454
        %526 = vmatmul.bf16.gmra.mxu0 %v354
        %v527 = vpop.f32.mrf.mxu0
        %v528 = vadd.f32 0.0, %v527
        %v529 = vpop.f32.mrf.mxu0
        %v530 = vadd.f32 0.0, %v529
        %531 = vdwg.mxu0
        %532 = vmatpush.bf16.msra.mxu0 %v484
        %533 = vmatpush.bf16.msra.mxu0 %v482
        %534 = vmatpush.bf16.msra.mxu0 %v480
        %535 = vmatpush.bf16.msra.mxu0 %v478
        %536 = vmatpush.bf16.msra.mxu0 %v476
        %537 = vmatpush.bf16.msra.mxu0 %v474
        %538 = vmatpush.bf16.msra.mxu0 %v472
        %539 = vmatpush.bf16.msra.mxu0 %v470
        %540 = vmatmul.bf16.gmra.mxu0 %v355
        %v541 = vpop.f32.mrf.mxu0
        %v542 = vadd.f32 %v528, %v541
        %v543 = vpop.f32.mrf.mxu0
        %v544 = vadd.f32 %v530, %v543
        %545 = vdwg.mxu0
        %546 = vmatpush.bf16.msra.mxu0 %v469
        %547 = vmatpush.bf16.msra.mxu0 %v467
        %548 = vmatpush.bf16.msra.mxu0 %v465
        %549 = vmatpush.bf16.msra.mxu0 %v463
        %550 = vmatpush.bf16.msra.mxu0 %v461
        %551 = vmatpush.bf16.msra.mxu0 %v459
        %552 = vmatpush.bf16.msra.mxu0 %v457
        %553 = vmatpush.bf16.msra.mxu0 %v455
        %554 = vmatmul.bf16.gmra.mxu0 %v354
        %v555 = vpop.f32.mrf.mxu0
        %v556 = vadd.f32 0.0, %v555
        %v557 = vpop.f32.mrf.mxu0
        %v558 = vadd.f32 0.0, %v557
        %559 = vdwg.mxu0
        %560 = vmatpush.bf16.msra.mxu0 %v485
        %561 = vmatpush.bf16.msra.mxu0 %v483
        %562 = vmatpush.bf16.msra.mxu0 %v481
        %563 = vmatpush.bf16.msra.mxu0 %v479
        %564 = vmatpush.bf16.msra.mxu0 %v477
        %565 = vmatpush.bf16.msra.mxu0 %v475
        %566 = vmatpush.bf16.msra.mxu0 %v473
        %567 = vmatpush.bf16.msra.mxu0 %v471
        %568 = vmatmul.bf16.gmra.mxu0 %v355
        %v569 = vpop.f32.mrf.mxu0
        %v570 = vadd.f32 %v556, %v569
        %v571 = vpop.f32.mrf.mxu0
        %v572 = vadd.f32 %v558, %v571
        %573 = vdwg.mxu0
        %v574 = vadd.f32 %v542, %v544
        %v575 = vrot.slane %v574, 4
        %v576 = vadd.f32 %v574, %v575
        %v577 = vrot.slane %v576, 2
        %v578 = vadd.f32 %v576, %v577
        %v579 = vrot.slane %v578, 1
        %v580 = vadd.f32 %v578, %v579
        %v581 = vadd.f32 %v570, %v572
        %v582 = vrot.slane %v581, 4
        %v583 = vadd.f32 %v581, %v582
        %v584 = vrot.slane %v583, 2
        %v585 = vadd.f32 %v583, %v584
        %v586 = vrot.slane %v585, 1
        %v587 = vadd.f32 %v585, %v586
        %v588 = vrcp.pop 16.0
        %v589 = vmul.f32 16.0, %v588
        %v590 = vsub.f32 1.0, %v589
        %v591 = vmul.f32 %v588, %v590
        %v592 = vadd.f32 %v588, %v591
        %vm593 = vweird.f32 %v588
        %v594 = vsel %vm593, %v588, %v592
        %v595 = vmul.f32 %v580, %v594
        %v596 = vmul.f32 %v587, %v594
        %v597 = vsub.f32 %v542, %v595
        %v598 = vsub.f32 %v570, %v596
        %v599 = vsub.f32 %v544, %v595
        %v600 = vsub.f32 %v572, %v596
        %v601 = vmul.f32 %v597, %v597
        %v602 = vmul.f32 %v598, %v598
        %v603 = vmul.f32 %v599, %v599
        %v604 = vmul.f32 %v600, %v600
        %v605 = vadd.f32 %v601, %v603
        %v606 = vrot.slane %v605, 4
        %v607 = vadd.f32 %v605, %v606
        %v608 = vrot.slane %v607, 2
        %v609 = vadd.f32 %v607, %v608
        %v610 = vrot.slane %v609, 1
        %v611 = vadd.f32 %v609, %v610
        %v612 = vadd.f32 %v602, %v604
        %v613 = vrot.slane %v612, 4
        %v614 = vadd.f32 %v612, %v613
        %v615 = vrot.slane %v614, 2
        %v616 = vadd.f32 %v614, %v615
        %v617 = vrot.slane %v616, 1
        %v618 = vadd.f32 %v616, %v617
        %v619 = vmul.f32 %v611, %v594
        %v620 = vmul.f32 %v618, %v594
        %v621 = vadd.f32 %v619, 1e-05
        %v622 = vadd.f32 %v620, 1e-05
        %v623 = vrsqrt.pop %v621
        %v624 = vmul.f32 %v623, %v621
        %v625 = vmul.f32 %v624, %v623
        %v626 = vmul.f32 0.5, %v625
        %v627 = vsub.f32 1.5, %v626
        %v628 = vmul.f32 %v623, %v627
        %vm629 = vweird.f32 %v621
        %vm630 = vweird.f32 %v623
        %vm631 = vmor %vm629, %vm630
        %v632 = vsel %vm631, %v623, %v628
        %v633 = vrsqrt.pop %v622
        %v634 = vmul.f32 %v633, %v622
        %v635 = vmul.f32 %v634, %v633
        %v636 = vmul.f32 0.5, %v635
        %v637 = vsub.f32 1.5, %v636
        %v638 = vmul.f32 %v633, %v637
        %vm639 = vweird.f32 %v622
        %vm640 = vweird.f32 %v633
        %vm641 = vmor %vm639, %vm640
        %v642 = vsel %vm641, %v633, %v638
        %v643 = vld [vmem:[%s264] sm:$0x3]
        %v645 = vperm.slane %v643, 0
        %v646 = vperm.slane %v643, 1
        %v649 = vmul.f32 %v632, %v645
        %v650 = vmul.f32 %v642, %v646
        %v651 = vperm.slane %v649, 0
        %v652 = vperm.slane %v650, 0
        %v653 = vmul.f32 %v597, %v651
        %v654 = vmul.f32 %v598, %v652
        %v655 = vmul.f32 %v599, %v651
        %v656 = vmul.f32 %v600, %v652
        %v657 = vld [vmem:[%s274] sm:$0x3]
        %v659 = vperm.slane %v657, 0
        %v660 = vperm.slane %v657, 1
        %v663 = vadd.f32 %v653, %v659
        %v664 = vadd.f32 %v654, %v660
        %v665 = vadd.f32 %v655, %v659
        %v666 = vadd.f32 %v656, %v660
        %v667 = vmax.f32 %v663, 0.0
        %v668 = vmax.f32 %v664, 0.0
        %v669 = vmax.f32 %v665, 0.0
        %v670 = vmax.f32 %v666, 0.0
        %v671 = vpack.c.bf16 %v668, %v667
        %v672 = vpack.c.bf16 %v670, %v669
        %673 = vst [vmem:[%s309] sm:$0xff] %v671
        %674 = vst [vmem:[%s309 + $0x8] sm:$0xff] %v672
        %s675 = sand.u32 %s132, 1
        %s676 = scalar_lea.sflag [#allocation4], %s675
        %s677 = sand.u32 %s132, 1
        %s678 = smul.addr %s677, 16
        %s679 = scalar_lea.vmem [#allocation10], %s678
        // Predicated region
        $region53: #{tpu_custom_call.1} parent=35 // pred_check
          %p680 = pneg %p142
        $region54: #{tpu_custom_call.1} parent=35 // pred_check_branch
          %682 = sbr.rel (%p680) target = $region56
        $region55: #{tpu_custom_call.1} parent=35 // pred_region
          %s683 = smul.u32 2, %s25
          %685 = vsyncadd %s676, 0
          %s686 = smul.addr %s683, 4
          %s687 = scalar_lea.hbm %s4, %s686
          %s688 = sshll.u32 %s679, 4
          %s689 = int_to_ptr.vmem [resolvable:$true] %s688
          %s690 = sshll.u32 %s687, 4
          %s691 = int_to_ptr.hbm [resolvable:$true] %s690
          %696 = dma.vmem_to_hbm [thread:$0]  %s689, 256, %s691, %s676, 128, 256, 8
        $region56: #{tpu_custom_call.1} parent=35 // pred_fallthru
          _
      $region36: #{tpu_custom_call.1} parent=5 // pred_fallthru
        _
      %p697 = scmp.le.s32.totalorder 2, %s20
      // Predicated region
      $region57: #{tpu_custom_call.1} parent=5 // pred_check
        %p698 = pneg %p697
      $region58: #{tpu_custom_call.1} parent=5 // pred_check_branch
        %700 = sbr.rel (%p698) target = $region60
      $region59: #{tpu_custom_call.1} parent=5 // pred_region
        %s701 = ssub.s32 %s20, 2
        // Predicated region
        $region61: #{tpu_custom_call.1} parent=59 // pred_check
          %p702 = pneg %p148
        $region62: #{tpu_custom_call.1} parent=59 // pred_check_branch
          %704 = sbr.rel (%p702) target = $region64
        $region63: #{tpu_custom_call.1} parent=59 // pred_region
          %s705 = sand.u32 %s133, 1
          %s706 = scalar_lea.sflag [#allocation4], %s705
          %s707 = sand.u32 %s133, 1
          %s708 = smul.addr %s707, 16
          %s709 = scalar_lea.vmem [#allocation10], %s708
          %711 = dma.done %s706, 256
        $region64: #{tpu_custom_call.1} parent=59 // pred_fallthru
          _
      $region60: #{tpu_custom_call.1} parent=5 // pred_fallthru
        _
    $region6: #{tpu_custom_call.1} parent=1 // loop_footer
      %s24 = sadd.s32 1, %s20
    $region7: #{tpu_custom_call.1} parent=1 // loop_footer_branch
      %19 = sbr.rel target = $region3
    $region8: #{tpu_custom_call.1} parent=1 // loop_exit
      _
    %712 = vsyncpa [#allocation3], 1
    %s713 = scalar_lea.sflag [#allocation3], 1
    %714 = vsyncpa %s713, 1
    %715 = vsyncpa [#allocation6], 1
    %s716 = scalar_lea.sflag [#allocation6], 1
    %717 = vsyncpa %s716, 1
    %718 = vsyncpa [#allocation9], 1
    %s719 = scalar_lea.sflag [#allocation9], 1
    %720 = vsyncpa %s719, 1
    %721 = vsyncpa [#allocation4], 1
    %s722 = scalar_lea.sflag [#allocation4], 1
    %723 = vsyncpa %s722, 1

</llo_original>
